<compile_context>
chip_gen: v7x
topology: tpu7x:2x2x1
jax: 0.10.0
libtpu: 0.0.40
codegen_flags: <defaults>
</compile_context>

<pallas_src>
import functools

import jax
import jax.numpy as jnp
from jax.experimental import pallas as pl
from jax.experimental.pallas import tpu as pltpu


def channel_gate_kernel(x_ref, w1_ref, b1_ref, w2_ref, b2_ref, o_ref, *, s_valid):
    # x_ref block: (1, C, S_pad) f32
    x = x_ref[0]                                            # (C, S_pad)
    s_pad = x.shape[-1]

    # Global pooling over the flattened spatial axis (lane reduction, XLU).
    # Mean uses the true element count; zero padding does not perturb the sum.
    avg_pool = jnp.sum(x, axis=-1, keepdims=True) * (1.0 / s_valid)      # (C, 1)
    if s_pad != s_valid:
        lane = jax.lax.broadcasted_iota(jnp.int32, x.shape, 1)
        x_for_max = jnp.where(lane < s_valid, x, -jnp.inf)
    else:
        x_for_max = x
    max_pool = jnp.max(x_for_max, axis=-1, keepdims=True)                # (C, 1)

    # Shared MLP applied once to both pools stacked on the lane axis: (C, 2).
    pools = jnp.concatenate([avg_pool, max_pool], axis=-1)               # (C, 2)

    h = jnp.dot(w1_ref[...], pools,
                preferred_element_type=jnp.float32) + b1_ref[...]        # (Cr, 2)
    h = jnp.maximum(h, 0.0)
    att = jnp.dot(w2_ref[...], h,
                  preferred_element_type=jnp.float32) + b2_ref[...]      # (C, 2)
    # Summing the two columns == mlp(avg) + mlp(max) (b2 correctly counted twice).
    att = jnp.sum(att, axis=-1, keepdims=True)                           # (C, 1)
    scale = jax.nn.sigmoid(att)                                          # (C, 1)

    o_ref[0] = x * scale                                 # (C,1) bcast over (C,S_pad)


@jax.jit
def channel_gate(x, w1, b1, w2, b2):
    """ChannelGate forward.

    x : (B, C, D, H, W) f32
    w1: (Cr, C)  -- PyTorch Linear(C, Cr).weight layout
    b1: (Cr,)
    w2: (C, Cr)  -- PyTorch Linear(Cr, C).weight layout
    b2: (C,)
    """
    B, C, D, H, W = x.shape
    S = D * H * W
    Cr = w1.shape[0]

    # Lane-dense output: pad S up to a multiple of 128.
    S_pad = pl.cdiv(S, 128) * 128
    x_flat = x.reshape(B, C, S)
    if S_pad != S:
        x_flat = jnp.pad(x_flat, ((0, 0), (0, 0), (0, S_pad - S)))

    # Pad the tiny hidden dim to a full sublane group (zeros are a no-op through
    # ReLU and the zero-padded columns of w2).
    Cr_pad = max(8, pl.cdiv(Cr, 8) * 8)
    w1_p = jnp.zeros((Cr_pad, C), x.dtype).at[:Cr, :].set(w1)
    b1_p = jnp.zeros((Cr_pad, 1), x.dtype).at[:Cr, 0].set(b1)
    w2_p = jnp.zeros((C, Cr_pad), x.dtype).at[:, :Cr].set(w2)
    b2_p = b2.reshape(C, 1)

    # VMEM budget: double-buffered (C, S_pad) slabs for input + output, plus weights.
    slab_bytes = C * S_pad * 4
    vmem_limit = min(max(4 * slab_bytes + (4 << 20), 32 << 20), 64 << 20)
    # TODO(synk): for large 3D volumes (C*S_pad*4 >> 8 MiB) restructure into an
    # S-tiled two-phase grid (pool+MLP pass, then rescale pass) to fit v7x's 64 MiB VMEM.

    kernel = functools.partial(channel_gate_kernel, s_valid=S)

    out_flat = pl.pallas_call(
        kernel,
        out_shape=jax.ShapeDtypeStruct((B, C, S_pad), x.dtype),
        grid_spec=pltpu.PrefetchScalarGridSpec(
            num_scalar_prefetch=0,
            grid=(B,),
            in_specs=[
                pl.BlockSpec((1, C, S_pad), lambda b: (b, 0, 0)),
                pl.BlockSpec((Cr_pad, C), lambda b: (0, 0)),
                pl.BlockSpec((Cr_pad, 1), lambda b: (0, 0)),
                pl.BlockSpec((C, Cr_pad), lambda b: (0, 0)),
                pl.BlockSpec((C, 1), lambda b: (0, 0)),
            ],
            out_specs=pl.BlockSpec((1, C, S_pad), lambda b: (b, 0, 0)),
        ),
        input_output_aliases={0: 0},
        compiler_params=pltpu.CompilerParams(
            dimension_semantics=("parallel",),
            vmem_limit_bytes=vmem_limit,
        ),
    )(x_flat, w1_p, b1_p, w2_p, b2_p)

    if S_pad != S:
        out_flat = out_flat[:, :, :S]
    return out_flat.reshape(B, C, D, H, W)


def channel_gate_ref(x, w1, b1, w2, b2):
    """Pure-JAX reference matching the PyTorch forward (PyTorch weight layout)."""
    B, C = x.shape[:2]
    flat = x.reshape(B, C, -1)
    avg_pool = jnp.mean(flat, axis=-1)                       # (B, C)
    max_pool = jnp.max(flat, axis=-1)                        # (B, C)

    def mlp(p):
        h = jnp.maximum(p @ w1.T + b1, 0.0)
        return h @ w2.T + b2

    scale = jax.nn.sigmoid(mlp(avg_pool) + mlp(max_pool))    # (B, C)
    return x * scale[:, :, None, None, None]


if __name__ == "__main__":
    # Module config: gate_channels=64, reduction_ratio=16 -> hidden = 4.
    B, C, D, H, W = 2, 64, 8, 8, 8
    Cr = C // 16

    key = jax.random.PRNGKey(0)
    kx, k1, k2, k3, k4 = jax.random.split(key, 5)

    x = jax.random.normal(kx, (B, C, D, H, W), dtype=jnp.float32)

    # PyTorch Linear weight layouts: Linear(C, Cr).weight is (Cr, C),
    # Linear(Cr, C).weight is (C, Cr).
    w1 = jax.random.normal(k1, (Cr, C), dtype=jnp.float32) * 0.1
    b1 = jax.random.normal(k2, (Cr,), dtype=jnp.float32) * 0.1
    w2 = jax.random.normal(k3, (C, Cr), dtype=jnp.float32) * 0.1
    b2 = jax.random.normal(k4, (C,), dtype=jnp.float32) * 0.1

    out = channel_gate(x, w1, b1, w2, b2)
    out = jax.block_until_ready(out)

    ref = channel_gate_ref(x, w1, b1, w2, b2)
    assert out.shape == (B, C, D, H, W)
    assert jnp.allclose(out, ref, atol=1e-5, rtol=1e-5)

    print("KERNEL_OK")
</pallas_src>

<mosaic_0001>
module attributes {stable_mosaic.version = 11 : i64} {
  func.func @channel_gate_kernel(%arg0: i32, %arg1: memref<1x64x512xf32, #tpu.memory_space<vmem>>, %arg2: memref<8x64xf32, #tpu.memory_space<vmem>>, %arg3: memref<8x1xf32, #tpu.memory_space<vmem>>, %arg4: memref<64x8xf32, #tpu.memory_space<vmem>>, %arg5: memref<64x1xf32, #tpu.memory_space<vmem>>, %arg6: memref<1x64x512xf32, #tpu.memory_space<vmem>>) attributes {dimension_semantics = [#tpu.dimension_semantics<parallel>], iteration_bounds = array<i64: 2>, scalar_prefetch = 0 : i64, scratch_operands = 0 : i64, tpu.core_type = #tpu.core_type<tc>, window_params = [{transform_indices = @transform_0, window_bounds = array<i64: 1, 64, 512>}, {pipeline_mode = #tpu.pipeline_mode<synchronous>, transform_indices = @transform_1, window_bounds = array<i64: 8, 64>}, {pipeline_mode = #tpu.pipeline_mode<synchronous>, transform_indices = @transform_2, window_bounds = array<i64: 8, 1>}, {pipeline_mode = #tpu.pipeline_mode<synchronous>, transform_indices = @transform_3, window_bounds = array<i64: 64, 8>}, {pipeline_mode = #tpu.pipeline_mode<synchronous>, transform_indices = @transform_4, window_bounds = array<i64: 64, 1>}, {transform_indices = @transform_5, window_bounds = array<i64: 1, 64, 512>}]} {
    %c0 = arith.constant 0 : index
    %c0_0 = arith.constant 0 : index
    %c0_1 = arith.constant 0 : index
    %0 = vector.load %arg1[%c0, %c0_0, %c0_1] : memref<1x64x512xf32, #tpu.memory_space<vmem>>, vector<1x64x512xf32>
    %1 = vector.shape_cast %0 : vector<1x64x512xf32> to vector<64x512xf32>
    %cst = arith.constant dense<0.000000e+00> : vector<64xf32>
    %2 = vector.multi_reduction <add>, %1, %cst [1] : vector<64x512xf32> to vector<64xf32>
    %3 = vector.shape_cast %2 : vector<64xf32> to vector<64x1xf32>
    %cst_2 = arith.constant 0.001953125 : f32
    %4 = vector.broadcast %cst_2 : f32 to vector<64x1xf32>
    %5 = arith.mulf %3, %4 : vector<64x1xf32>
    %cst_3 = arith.constant dense<0xFF800000> : vector<64xf32>
    %6 = vector.multi_reduction <maximumf>, %1, %cst_3 [1] : vector<64x512xf32> to vector<64xf32>
    %7 = vector.shape_cast %6 : vector<64xf32> to vector<64x1xf32>
    %8 = tpu.concatenate %5, %7 in 1 : vector<64x1xf32>, vector<64x1xf32> -> vector<64x2xf32>
    %c0_4 = arith.constant 0 : index
    %c0_5 = arith.constant 0 : index
    %9 = vector.load %arg2[%c0_4, %c0_5] : memref<8x64xf32, #tpu.memory_space<vmem>>, vector<8x64xf32>
    %cst_6 = arith.constant dense<0.000000e+00> : vector<8x2xf32>
    %10 = tpu.matmul %9, %8, %cst_6 {dimension_numbers = #tpu.dot_dimension_numbers<[1], [0], [0], [1], [0, 0, 1, 1], [], []>} : vector<8x64xf32>, vector<64x2xf32>, vector<8x2xf32> -> vector<8x2xf32>
    %c0_7 = arith.constant 0 : index
    %c0_8 = arith.constant 0 : index
    %11 = vector.load %arg3[%c0_7, %c0_8] : memref<8x1xf32, #tpu.memory_space<vmem>>, vector<8x1xf32>
    %12 = vector.broadcast %11 : vector<8x1xf32> to vector<8x2xf32>
    %13 = arith.addf %10, %12 : vector<8x2xf32>
    %cst_9 = arith.constant 0.000000e+00 : f32
    %14 = vector.broadcast %cst_9 : f32 to vector<8x2xf32>
    %15 = arith.maximumf %13, %14 : vector<8x2xf32>
    %c0_10 = arith.constant 0 : index
    %c0_11 = arith.constant 0 : index
    %16 = vector.load %arg4[%c0_10, %c0_11] : memref<64x8xf32, #tpu.memory_space<vmem>>, vector<64x8xf32>
    %cst_12 = arith.constant dense<0.000000e+00> : vector<64x2xf32>
    %17 = tpu.matmul %16, %15, %cst_12 {dimension_numbers = #tpu.dot_dimension_numbers<[1], [0], [0], [1], [0, 0, 1, 1], [], []>} : vector<64x8xf32>, vector<8x2xf32>, vector<64x2xf32> -> vector<64x2xf32>
    %c0_13 = arith.constant 0 : index
    %c0_14 = arith.constant 0 : index
    %18 = vector.load %arg5[%c0_13, %c0_14] : memref<64x1xf32, #tpu.memory_space<vmem>>, vector<64x1xf32>
    %19 = vector.broadcast %18 : vector<64x1xf32> to vector<64x2xf32>
    %20 = arith.addf %17, %19 : vector<64x2xf32>
    %cst_15 = arith.constant dense<0.000000e+00> : vector<64xf32>
    %21 = vector.multi_reduction <add>, %20, %cst_15 [1] : vector<64x2xf32> to vector<64xf32>
    %22 = vector.shape_cast %21 : vector<64xf32> to vector<64x1xf32>
    %23 = arith.negf %22 : vector<64x1xf32>
    %24 = math.exp %23 : vector<64x1xf32>
    %cst_16 = arith.constant 1.000000e+00 : f32
    %25 = vector.broadcast %cst_16 : f32 to vector<64x1xf32>
    %26 = arith.addf %25, %24 : vector<64x1xf32>
    %27 = arith.divf %25, %26 : vector<64x1xf32>
    %28 = vector.broadcast %27 : vector<64x1xf32> to vector<64x512xf32>
    %29 = arith.mulf %1, %28 : vector<64x512xf32>
    %c0_17 = arith.constant 0 : index
    %c0_18 = arith.constant 0 : index
    %c0_19 = arith.constant 0 : index
    %30 = vector.load %arg6[%c0_17, %c0_18, %c0_19] : memref<1x64x512xf32, #tpu.memory_space<vmem>>, vector<1x64x512xf32>
    %31 = vector.shape_cast %30 : vector<1x64x512xf32> to vector<64x512xf32>
    %32 = vector.shape_cast %29 : vector<64x512xf32> to vector<1x64x512xf32>
    tpu.vector_store %arg6[%c0_17, %c0_18, %c0_19], %32 {strides = array<i32>} : memref<1x64x512xf32, #tpu.memory_space<vmem>>, vector<1x64x512xf32>,
    return
  }
  func.func @transform_0(%arg0: i32) -> (i32, i32, i32) {
    %c0_i32 = arith.constant 0 : i32
    %c0_i32_0 = arith.constant 0 : i32
    %c0_i32_1 = arith.constant 0 : i32
    return %arg0, %c0_i32, %c0_i32_0 : i32, i32, i32
  }
  func.func @transform_1(%arg0: i32) -> (i32, i32) {
    %c0_i32 = arith.constant 0 : i32
    %c0_i32_0 = arith.constant 0 : i32
    %c0_i32_1 = arith.constant 0 : i32
    return %c0_i32, %c0_i32_0 : i32, i32
  }
  func.func @transform_2(%arg0: i32) -> (i32, i32) {
    %c0_i32 = arith.constant 0 : i32
    %c0_i32_0 = arith.constant 0 : i32
    %c0_i32_1 = arith.constant 0 : i32
    return %c0_i32, %c0_i32_0 : i32, i32
  }
  func.func @transform_3(%arg0: i32) -> (i32, i32) {
    %c0_i32 = arith.constant 0 : i32
    %c0_i32_0 = arith.constant 0 : i32
    %c0_i32_1 = arith.constant 0 : i32
    return %c0_i32, %c0_i32_0 : i32, i32
  }
  func.func @transform_4(%arg0: i32) -> (i32, i32) {
    %c0_i32 = arith.constant 0 : i32
    %c0_i32_0 = arith.constant 0 : i32
    %c0_i32_1 = arith.constant 0 : i32
    return %c0_i32, %c0_i32_0 : i32, i32
  }
  func.func @transform_5(%arg0: i32) -> (i32, i32, i32) {
    %c0_i32 = arith.constant 0 : i32
    %c0_i32_0 = arith.constant 0 : i32
    %c0_i32_1 = arith.constant 0 : i32
    return %arg0, %c0_i32, %c0_i32_0 : i32, i32, i32
  }
}

</mosaic_0001>

<llo_original>
// kernel: channel_gate.1
$region0: #{channel_gate.1}
  #allocation0 [shape = 'u32[]', space=smem, size = 0x4, offset = 0x4, fixed_abs, tag = 'smem constant byte address 0x4 - core index']
  #allocation1 [shape = 'u32[144,128]{1,0:T(1,128)}', space=vmem, size = 0x12000, scoped, tag = 'internal scratch']
  %s0 = inlined_call_operand.vmem [shape: f32[2,64,512], index: 0, kind: input, shape index: {}, may-alias: {0,5}]
  %s1 = inlined_call_operand.vmem [shape: f32[8,64], index: 1, kind: input, shape index: {}]
  %s2 = inlined_call_operand.vmem [shape: f32[8,1], index: 2, kind: input, shape index: {}]
  %s3 = inlined_call_operand.vmem [shape: f32[64,8], index: 3, kind: input, shape index: {}]
  %s4 = inlined_call_operand.vmem [shape: f32[64,1], index: 4, kind: input, shape index: {}]
  %s5 = inlined_call_operand.vmem [shape: f32[2,64,512], index: 5, kind: output, shape index: {}, may-alias: {0,5}]
  %s6 = sld [smem:[#allocation0]]
  $region53: #{channel_gate.1} parent=0
    _
  %s8 = ssub.s32 1, %s6
  %s9 = scalar_select 0, %s8, %s6
  loop: start=0, step=1, limit=4
  $region2: #{channel_gate.1} parent=0 // loop_pre_header
    _
  $region3: #{channel_gate.1} parent=0 // loop_header
    %s11 = sphi 0, %s15
    %p12 = scmp.ge.s32.totalorder %s11, 4
    %s21 = sphi 0, %s23
    %s24 = sphi 0, %s21
    %s25 = sphi 0, %s24
    %s41 = sphi 0, %s25
    %s45 = sphi 0, %s45
    %s47 = sphi 0, %s45
    %s48 = sphi 0, %s47
    %s62 = sphi 0, %s48
    %s66 = sphi 0, %s66
    %s68 = sphi 0, %s66
    %s69 = sphi 0, %s68
    %s83 = sphi 0, %s69
    %s87 = sphi 0, %s87
    %s89 = sphi 0, %s87
    %s90 = sphi 0, %s89
    %s104 = sphi 0, %s90
    %s108 = sphi 0, %s108
    %s110 = sphi 0, %s108
    %s111 = sphi 0, %s110
    %s125 = sphi 0, %s111
    %s131 = sphi 0, %s133
    %s134 = sphi 0, %s131
    %s135 = sphi 0, %s134
    %s151 = sphi 0, %s135
  $region4: #{channel_gate.1} parent=0 // loop_header_branch
    %14 = sbr.rel (%p12) target = $region8
  $region5: #{channel_gate.1} parent=0 // loop_body
    %s16 = ssub.s32 %s11, 1
    %s17 = ssub.s32 %s11, 2
    %s18 = sadd.s32 %s11, 1
    %s19 = ssub.s32 %s11, %s18
    %p20 = scmp.eq.s32.totalorder %s19, 0
    %s22 = sadd.s32 %s21, 1
    %s23 = scalar_select %p20, %s21, %s22
    %p26 = pneg %p20
    %p27 = scmp.eq.s32.totalorder %s11, 1
    %p28 = por %p26, %p27
    %p29 = scmp.ne.s32.totalorder %s21, %s24
    %p30 = scmp.eq.s32.totalorder %s11, 0
    %p31 = por %p29, %p30
    %p32 = scmp.ne.s32.totalorder %s21, %s24
    %p33 = scmp.eq.s32.totalorder %s16, 1
    %p34 = por %p32, %p33
    %p35 = scmp.ne.s32.totalorder %s24, %s25
    %p36 = scmp.eq.s32.totalorder %s16, 0
    %p37 = por %p35, %p36
    %p38 = scmp.ne.s32.totalorder %s24, %s25
    %p39 = scmp.eq.s32.totalorder %s17, 1
    %p40 = por %p38, %p39
    %p42 = scmp.ne.s32.totalorder %s25, %s41
    %p43 = scmp.eq.s32.totalorder %s17, 0
    %p44 = por %p42, %p43
    %s46 = sadd.s32 %s45, 1
    %p49 = scmp.eq.s32.totalorder %s11, 1
    %p50 = scmp.ne.s32.totalorder %s45, %s47
    %p51 = scmp.eq.s32.totalorder %s11, 0
    %p52 = por %p50, %p51
    %p53 = scmp.ne.s32.totalorder %s45, %s47
    %p54 = scmp.eq.s32.totalorder %s16, 1
    %p55 = por %p53, %p54
    %p56 = scmp.ne.s32.totalorder %s47, %s48
    %p57 = scmp.eq.s32.totalorder %s16, 0
    %p58 = por %p56, %p57
    %p59 = scmp.ne.s32.totalorder %s47, %s48
    %p60 = scmp.eq.s32.totalorder %s17, 1
    %p61 = por %p59, %p60
    %p63 = scmp.ne.s32.totalorder %s48, %s62
    %p64 = scmp.eq.s32.totalorder %s17, 0
    %p65 = por %p63, %p64
    %s67 = sadd.s32 %s66, 1
    %p70 = scmp.eq.s32.totalorder %s11, 1
    %p71 = scmp.ne.s32.totalorder %s66, %s68
    %p72 = scmp.eq.s32.totalorder %s11, 0
    %p73 = por %p71, %p72
    %p74 = scmp.ne.s32.totalorder %s66, %s68
    %p75 = scmp.eq.s32.totalorder %s16, 1
    %p76 = por %p74, %p75
    %p77 = scmp.ne.s32.totalorder %s68, %s69
    %p78 = scmp.eq.s32.totalorder %s16, 0
    %p79 = por %p77, %p78
    %p80 = scmp.ne.s32.totalorder %s68, %s69
    %p81 = scmp.eq.s32.totalorder %s17, 1
    %p82 = por %p80, %p81
    %p84 = scmp.ne.s32.totalorder %s69, %s83
    %p85 = scmp.eq.s32.totalorder %s17, 0
    %p86 = por %p84, %p85
    %s88 = sadd.s32 %s87, 1
    %p91 = scmp.eq.s32.totalorder %s11, 1
    %p92 = scmp.ne.s32.totalorder %s87, %s89
    %p93 = scmp.eq.s32.totalorder %s11, 0
    %p94 = por %p92, %p93
    %p95 = scmp.ne.s32.totalorder %s87, %s89
    %p96 = scmp.eq.s32.totalorder %s16, 1
    %p97 = por %p95, %p96
    %p98 = scmp.ne.s32.totalorder %s89, %s90
    %p99 = scmp.eq.s32.totalorder %s16, 0
    %p100 = por %p98, %p99
    %p101 = scmp.ne.s32.totalorder %s89, %s90
    %p102 = scmp.eq.s32.totalorder %s17, 1
    %p103 = por %p101, %p102
    %p105 = scmp.ne.s32.totalorder %s90, %s104
    %p106 = scmp.eq.s32.totalorder %s17, 0
    %p107 = por %p105, %p106
    %s109 = sadd.s32 %s108, 1
    %p112 = scmp.eq.s32.totalorder %s11, 1
    %p113 = scmp.ne.s32.totalorder %s108, %s110
    %p114 = scmp.eq.s32.totalorder %s11, 0
    %p115 = por %p113, %p114
    %p116 = scmp.ne.s32.totalorder %s108, %s110
    %p117 = scmp.eq.s32.totalorder %s16, 1
    %p118 = por %p116, %p117
    %p119 = scmp.ne.s32.totalorder %s110, %s111
    %p120 = scmp.eq.s32.totalorder %s16, 0
    %p121 = por %p119, %p120
    %p122 = scmp.ne.s32.totalorder %s110, %s111
    %p123 = scmp.eq.s32.totalorder %s17, 1
    %p124 = por %p122, %p123
    %p126 = scmp.ne.s32.totalorder %s111, %s125
    %p127 = scmp.eq.s32.totalorder %s17, 0
    %p128 = por %p126, %p127
    %s129 = ssub.s32 %s11, %s18
    %p130 = scmp.eq.s32.totalorder %s129, 0
    %s132 = sadd.s32 %s131, 1
    %s133 = scalar_select %p130, %s131, %s132
    %p136 = pneg %p130
    %p137 = scmp.eq.s32.totalorder %s11, 1
    %p138 = por %p136, %p137
    %p139 = scmp.ne.s32.totalorder %s131, %s134
    %p140 = scmp.eq.s32.totalorder %s11, 0
    %p141 = por %p139, %p140
    %p142 = scmp.ne.s32.totalorder %s131, %s134
    %p143 = scmp.eq.s32.totalorder %s16, 1
    %p144 = por %p142, %p143
    %p145 = scmp.ne.s32.totalorder %s134, %s135
    %p146 = scmp.eq.s32.totalorder %s16, 0
    %p147 = por %p145, %p146
    %p148 = scmp.ne.s32.totalorder %s134, %s135
    %p149 = scmp.eq.s32.totalorder %s17, 1
    %p150 = por %p148, %p149
    %p152 = scmp.ne.s32.totalorder %s135, %s151
    %p153 = scmp.eq.s32.totalorder %s17, 0
    %p154 = por %p152, %p153
    %p155 = scmp.le.s32.totalorder 1, %s11
    %p156 = scmp.lt.s32.totalorder %s11, 3
    %p157 = pnand %p155, %p156
    %p158 = pneg %p157
    // Predicated region
    $region9: #{channel_gate.1} parent=5 // pred_check
      _
    $region10: #{channel_gate.1} parent=5 // pred_check_branch
      %160 = sbr.rel (%p157) target = $region12
    $region11: #{channel_gate.1} parent=5 // pred_region
      %s161 = ssub.s32 %s11, 1
      // Predicated region
      $region13: #{channel_gate.1} parent=11 // pred_check
        %p162 = pneg %p58
      $region14: #{channel_gate.1} parent=11 // pred_check_branch
        %164 = sbr.rel (%p162) target = $region16
      $region15: #{channel_gate.1} parent=11 // pred_region
        _
      $region16: #{channel_gate.1} parent=11 // pred_fallthru
        _
      // Predicated region
      $region17: #{channel_gate.1} parent=11 // pred_check
        %p165 = pneg %p79
      $region18: #{channel_gate.1} parent=11 // pred_check_branch
        %167 = sbr.rel (%p165) target = $region20
      $region19: #{channel_gate.1} parent=11 // pred_region
        _
      $region20: #{channel_gate.1} parent=11 // pred_fallthru
        _
      // Predicated region
      $region21: #{channel_gate.1} parent=11 // pred_check
        %p168 = pneg %p100
      $region22: #{channel_gate.1} parent=11 // pred_check_branch
        %170 = sbr.rel (%p168) target = $region24
      $region23: #{channel_gate.1} parent=11 // pred_region
        _
      $region24: #{channel_gate.1} parent=11 // pred_fallthru
        _
      // Predicated region
      $region25: #{channel_gate.1} parent=11 // pred_check
        %p171 = pneg %p121
      $region26: #{channel_gate.1} parent=11 // pred_check_branch
        %173 = sbr.rel (%p171) target = $region28
      $region27: #{channel_gate.1} parent=11 // pred_region
        _
      $region28: #{channel_gate.1} parent=11 // pred_fallthru
        _
    $region12: #{channel_gate.1} parent=5 // pred_fallthru
      _
    %p174 = scmp.lt.s32.totalorder %s11, 2
    // Predicated region
    $region29: #{channel_gate.1} parent=5 // pred_check
      %p175 = pneg %p174
    $region30: #{channel_gate.1} parent=5 // pred_check_branch
      %177 = sbr.rel (%p175) target = $region32
    $region31: #{channel_gate.1} parent=5 // pred_region
      // Predicated region
      $region33: #{channel_gate.1} parent=31 // pred_check
        %p178 = pneg %p31
      $region34: #{channel_gate.1} parent=31 // pred_check_branch
        %180 = sbr.rel (%p178) target = $region36
      $region35: #{channel_gate.1} parent=31 // pred_region
        %p181 = scmp.lt.s32.totalorder %s11, 1
        %s182 = scalar_select %p181, %s11, 1
        %s183 = smul.addr %s182, 32
        %s184 = smul.addr %s183, 8
        %s185 = scalar_lea.vmem %s0, %s184
      $region36: #{channel_gate.1} parent=31 // pred_fallthru
        _
    $region32: #{channel_gate.1} parent=5 // pred_fallthru
      _
    %p186 = scmp.le.s32.totalorder 1, %s11
    %p187 = scmp.lt.s32.totalorder %s11, 3
    %p188 = pnand %p186, %p187
    %p189 = pneg %p188
    // Predicated region
    $region37: #{channel_gate.1} parent=5 // pred_check
      _
    $region38: #{channel_gate.1} parent=5 // pred_check_branch
      %191 = sbr.rel (%p188) target = $region40
    $region39: #{channel_gate.1} parent=5 // pred_region
      %s192 = ssub.s32 %s11, 1
      %p193 = scmp.lt.s32.totalorder %s16, 1
      %s194 = scalar_select %p193, %s16, 1
      %s195 = smul.addr %s194, 32
      %s196 = smul.addr %s195, 8
      %s197 = scalar_lea.vmem %s0, %s196
      %p198 = pneg %p37
      %p199 = pneg %p34
      %p200 = pneg %p58
      %p201 = pneg %p55
      %p202 = pneg %p79
      %p203 = pneg %p76
      %p204 = pneg %p100
      %p205 = pneg %p97
      %p206 = pneg %p121
      %p207 = pneg %p118
      %p208 = pneg %p147
      %p209 = pneg %p144
      %p210 = scmp.lt.s32.totalorder %s16, 1
      %s211 = scalar_select %p210, %s16, 1
      %s212 = smul.addr %s211, 32
      %s213 = smul.addr %s212, 8
      %s214 = scalar_lea.vmem %s5, %s213
      %p215 = scmp.lt.s32.totalorder %s16, 1
      %s216 = scalar_select %p215, %s16, 1
      %s217 = smul.addr %s216, 32
      %s218 = smul.addr %s217, 8
      %s219 = scalar_lea.vmem %s0, %s218
      %p220 = scmp.lt.s32.totalorder %s16, 1
      %s221 = scalar_select %p220, %s16, 1
      %s222 = smul.addr %s221, 32
      %s223 = smul.addr %s222, 8
      %s224 = scalar_lea.vmem %s5, %s223
      %v225 = vld [vmem:[%s219] sm:$0xff]
      %v226 = vld [vmem:[%s219 + $0x8] sm:$0xff]
      %v227 = vld [vmem:[%s219 + $0x10] sm:$0xff]
      %v228 = vld [vmem:[%s219 + $0x18] sm:$0xff]
      %v229 = vld [vmem:[%s219 + $0x20] sm:$0xff]
      %v230 = vld [vmem:[%s219 + $0x28] sm:$0xff]
      %v231 = vld [vmem:[%s219 + $0x30] sm:$0xff]
      %v232 = vld [vmem:[%s219 + $0x38] sm:$0xff]
      %v233 = vld [vmem:[%s219 + $0x40] sm:$0xff]
      %v234 = vld [vmem:[%s219 + $0x48] sm:$0xff]
      %v235 = vld [vmem:[%s219 + $0x50] sm:$0xff]
      %v236 = vld [vmem:[%s219 + $0x58] sm:$0xff]
      %v237 = vld [vmem:[%s219 + $0x60] sm:$0xff]
      %v238 = vld [vmem:[%s219 + $0x68] sm:$0xff]
      %v239 = vld [vmem:[%s219 + $0x70] sm:$0xff]
      %v240 = vld [vmem:[%s219 + $0x78] sm:$0xff]
      %v241 = vld [vmem:[%s219 + $0x80] sm:$0xff]
      %v242 = vld [vmem:[%s219 + $0x88] sm:$0xff]
      %v243 = vld [vmem:[%s219 + $0x90] sm:$0xff]
      %v244 = vld [vmem:[%s219 + $0x98] sm:$0xff]
      %v245 = vld [vmem:[%s219 + $0xa0] sm:$0xff]
      %v246 = vld [vmem:[%s219 + $0xa8] sm:$0xff]
      %v247 = vld [vmem:[%s219 + $0xb0] sm:$0xff]
      %v248 = vld [vmem:[%s219 + $0xb8] sm:$0xff]
      %v249 = vld [vmem:[%s219 + $0xc0] sm:$0xff]
      %v250 = vld [vmem:[%s219 + $0xc8] sm:$0xff]
      %v251 = vld [vmem:[%s219 + $0xd0] sm:$0xff]
      %v252 = vld [vmem:[%s219 + $0xd8] sm:$0xff]
      %v253 = vld [vmem:[%s219 + $0xe0] sm:$0xff]
      %v254 = vld [vmem:[%s219 + $0xe8] sm:$0xff]
      %v255 = vld [vmem:[%s219 + $0xf0] sm:$0xff]
      %v256 = vld [vmem:[%s219 + $0xf8] sm:$0xff]
      %v257 = vadd.f32 %v225, %v226
      %v258 = vadd.f32 %v257, %v227
      %v259 = vadd.f32 %v258, %v228
      %260 = vadd.xlane.f32.xlu0 %v259
      %v261 = vpop.xlane.xlu0 %260
      %v262 = vadd.f32 %v229, %v230
      %v263 = vadd.f32 %v262, %v231
      %v264 = vadd.f32 %v263, %v232
      %265 = vadd.xlane.f32.xlu0 %v264
      %v266 = vpop.xlane.xlu0 %265
      %v267 = vadd.f32 %v233, %v234
      %v268 = vadd.f32 %v267, %v235
      %v269 = vadd.f32 %v268, %v236
      %270 = vadd.xlane.f32.xlu0 %v269
      %v271 = vpop.xlane.xlu0 %270
      %v272 = vadd.f32 %v237, %v238
      %v273 = vadd.f32 %v272, %v239
      %v274 = vadd.f32 %v273, %v240
      %275 = vadd.xlane.f32.xlu0 %v274
      %v276 = vpop.xlane.xlu0 %275
      %v277 = vadd.f32 %v241, %v242
      %v278 = vadd.f32 %v277, %v243
      %v279 = vadd.f32 %v278, %v244
      %280 = vadd.xlane.f32.xlu0 %v279
      %v281 = vpop.xlane.xlu0 %280
      %v282 = vadd.f32 %v245, %v246
      %v283 = vadd.f32 %v282, %v247
      %v284 = vadd.f32 %v283, %v248
      %285 = vadd.xlane.f32.xlu0 %v284
      %v286 = vpop.xlane.xlu0 %285
      %v287 = vadd.f32 %v249, %v250
      %v288 = vadd.f32 %v287, %v251
      %v289 = vadd.f32 %v288, %v252
      %290 = vadd.xlane.f32.xlu0 %v289
      %v291 = vpop.xlane.xlu0 %290
      %v292 = vadd.f32 %v253, %v254
      %v293 = vadd.f32 %v292, %v255
      %v294 = vadd.f32 %v293, %v256
      %295 = vadd.xlane.f32.xlu0 %v294
      %v296 = vpop.xlane.xlu0 %295
      %v297 = vmul.f32 %v261, 0.001953125
      %v298 = vmul.f32 %v266, 0.001953125
      %v299 = vmul.f32 %v271, 0.001953125
      %v300 = vmul.f32 %v276, 0.001953125
      %v301 = vmul.f32 %v281, 0.001953125
      %v302 = vmul.f32 %v286, 0.001953125
      %v303 = vmul.f32 %v291, 0.001953125
      %v304 = vmul.f32 %v296, 0.001953125
      %v305 = vmax.f32 %v225, %v226
      %v306 = vmax.f32 %v305, %v227
      %v307 = vmax.f32 %v306, %v228
      %308 = vmax.xlane.f32.xlu0 %v307
      %v309 = vpop.xlane.xlu0 %308
      %v310 = vmax.f32 %v229, %v230
      %v311 = vmax.f32 %v310, %v231
      %v312 = vmax.f32 %v311, %v232
      %313 = vmax.xlane.f32.xlu0 %v312
      %v314 = vpop.xlane.xlu0 %313
      %v315 = vmax.f32 %v233, %v234
      %v316 = vmax.f32 %v315, %v235
      %v317 = vmax.f32 %v316, %v236
      %318 = vmax.xlane.f32.xlu0 %v317
      %v319 = vpop.xlane.xlu0 %318
      %v320 = vmax.f32 %v237, %v238
      %v321 = vmax.f32 %v320, %v239
      %v322 = vmax.f32 %v321, %v240
      %323 = vmax.xlane.f32.xlu0 %v322
      %v324 = vpop.xlane.xlu0 %323
      %v325 = vmax.f32 %v241, %v242
      %v326 = vmax.f32 %v325, %v243
      %v327 = vmax.f32 %v326, %v244
      %328 = vmax.xlane.f32.xlu0 %v327
      %v329 = vpop.xlane.xlu0 %328
      %v330 = vmax.f32 %v245, %v246
      %v331 = vmax.f32 %v330, %v247
      %v332 = vmax.f32 %v331, %v248
      %333 = vmax.xlane.f32.xlu0 %v332
      %v334 = vpop.xlane.xlu0 %333
      %v335 = vmax.f32 %v249, %v250
      %v336 = vmax.f32 %v335, %v251
      %v337 = vmax.f32 %v336, %v252
      %338 = vmax.xlane.f32.xlu0 %v337
      %v339 = vpop.xlane.xlu0 %338
      %v340 = vmax.f32 %v253, %v254
      %v341 = vmax.f32 %v340, %v255
      %v342 = vmax.f32 %v341, %v256
      %343 = vmax.xlane.f32.xlu0 %v342
      %v344 = vpop.xlane.xlu0 %343
      %vm345 = vcmask 7168
      %v346 = vsel %vm345, %v297, %v309
      %v347 = vsel %vm345, %v298, %v314
      %v348 = vsel %vm345, %v299, %v319
      %v349 = vsel %vm345, %v300, %v324
      %v350 = vsel %vm345, %v301, %v329
      %v351 = vsel %vm345, %v302, %v334
      %v352 = vsel %vm345, %v303, %v339
      %v353 = vsel %vm345, %v304, %v344
      %v354 = vld [vmem:[%s1] sm:$0xff]
      %v355 = vld [vmem:[%s2] sm:$0xff]
      %357 = vset.pattern.permute.xlu0 0
      %358 = vperm.xlu0 %357, %v355
      %v359 = vpop.permute.xlu0 %358
      %vm361 = vcmask 523264
      %v363 = vsel %vm361, %v354, 0
      %365 = vmatprep.subr.mxu0 0.0
      %366 = vmatpush1.msra.mxu0 %v346
      %367 = vmatprep.subr.mxu0 0.0
      %368 = vmatpush1.msra.mxu0 %v347
      %369 = vmatprep.subr.mxu0 0.0
      %370 = vmatpush1.msra.mxu0 %v348
      %371 = vmatprep.subr.mxu0 0.0
      %372 = vmatpush1.msra.mxu0 %v349
      %373 = vmatprep.subr.mxu0 0.0
      %374 = vmatpush1.msra.mxu0 %v350
      %375 = vmatprep.subr.mxu0 0.0
      %376 = vmatpush1.msra.mxu0 %v351
      %377 = vmatprep.subr.mxu0 0.0
      %378 = vmatpush1.msra.mxu0 %v352
      %379 = vmatprep.subr.mxu0 0.0
      %380 = vmatpush1.msra.mxu0 %v353
      %381 = vmatprep.subr.mxu0 0.0
      %382 = vmatpush1.msra.mxu0 0.0
      %383 = vmatprep.subr.mxu0 0.0
      %384 = vmatpush1.msra.mxu0 0.0
      %385 = vmatprep.subr.mxu0 0.0
      %386 = vmatpush1.msra.mxu0 0.0
      %387 = vmatprep.subr.mxu0 0.0
      %388 = vmatpush1.msra.mxu0 0.0
      %389 = vmatprep.subr.mxu0 0.0
      %390 = vmatpush1.msra.mxu0 0.0
      %391 = vmatprep.subr.mxu0 0.0
      %392 = vmatpush1.msra.mxu0 0.0
      %393 = vmatprep.subr.mxu0 0.0
      %394 = vmatpush1.msra.mxu0 0.0
      %395 = vmatprep.subr.mxu0 0.0
      %396 = vmatpush1.msra.mxu0 0.0
      %397 = vmatprep.subr.mxu0 0.0
      %398 = vmatpush1.msra.mxu0 0.0
      %399 = vmatprep.subr.mxu0 0.0
      %400 = vmatpush1.msra.mxu0 0.0
      %401 = vmatprep.subr.mxu0 0.0
      %402 = vmatpush1.msra.mxu0 0.0
      %403 = vmatprep.subr.mxu0 0.0
      %404 = vmatpush1.msra.mxu0 0.0
      %405 = vmatprep.subr.mxu0 0.0
      %406 = vmatpush1.msra.mxu0 0.0
      %407 = vmatprep.subr.mxu0 0.0
      %408 = vmatpush1.msra.mxu0 0.0
      %409 = vmatprep.subr.mxu0 0.0
      %410 = vmatpush1.msra.mxu0 0.0
      %411 = vmatprep.subr.mxu0 0.0
      %412 = vmatpush1.msra.mxu0 0.0
      %413 = vmatprep.subr.mxu0 0.0
      %414 = vmatpush1.msra.mxu0 0.0
      %415 = vmatprep.subr.mxu0 0.0
      %416 = vmatpush1.msra.mxu0 0.0
      %417 = vmatprep.subr.mxu0 0.0
      %418 = vmatpush1.msra.mxu0 0.0
      %419 = vmatprep.subr.mxu0 0.0
      %420 = vmatpush1.msra.mxu0 0.0
      %421 = vmatprep.subr.mxu0 0.0
      %422 = vmatpush1.msra.mxu0 0.0
      %423 = vmatprep.subr.mxu0 0.0
      %424 = vmatpush1.msra.mxu0 0.0
      %425 = vmatprep.subr.mxu0 0.0
      %426 = vmatpush1.msra.mxu0 0.0
      %427 = vmatprep.subr.mxu0 0.0
      %428 = vmatpush1.msra.mxu0 0.0
      %429 = vmatprep.mubr.f32.mxu0 0.0
      %430 = vmatmul.mubr.f32.gmra.mrb[0].mxu0 %v363
      %v431 = vpop.f32.mrb[0].mxu0
      %v432 = vadd.f32 %v359, %v431
      %v433 = vpop.f32.mrb[0].mxu0
      %434 = vdwg.mxu0
      %v435 = vmax.f32 %v432, 0.0
      %v436 = vld [vmem:[%s3] sm:$0xff]
      %v437 = vld [vmem:[%s3 + $0x8] sm:$0xff]
      %v438 = vld [vmem:[%s3 + $0x10] sm:$0xff]
      %v439 = vld [vmem:[%s3 + $0x18] sm:$0xff]
      %v440 = vld [vmem:[%s3 + $0x20] sm:$0xff]
      %v441 = vld [vmem:[%s3 + $0x28] sm:$0xff]
      %v442 = vld [vmem:[%s3 + $0x30] sm:$0xff]
      %v443 = vld [vmem:[%s3 + $0x38] sm:$0xff]
      %v444 = vld [vmem:[%s4] sm:$0xff]
      %v445 = vld [vmem:[%s4 + $0x8] sm:$0xff]
      %v446 = vld [vmem:[%s4 + $0x10] sm:$0xff]
      %v447 = vld [vmem:[%s4 + $0x18] sm:$0xff]
      %v448 = vld [vmem:[%s4 + $0x20] sm:$0xff]
      %v449 = vld [vmem:[%s4 + $0x28] sm:$0xff]
      %v450 = vld [vmem:[%s4 + $0x30] sm:$0xff]
      %v451 = vld [vmem:[%s4 + $0x38] sm:$0xff]
      %453 = vset.pattern.permute.xlu0 0
      %454 = vperm.xlu0 %453, %v444
      %v455 = vpop.permute.xlu0 %454
      %458 = vset.pattern.permute.xlu0 0
      %459 = vperm.xlu0 %458, %v445
      %v460 = vpop.permute.xlu0 %459
      %463 = vset.pattern.permute.xlu0 0
      %464 = vperm.xlu0 %463, %v446
      %v465 = vpop.permute.xlu0 %464
      %468 = vset.pattern.permute.xlu0 0
      %469 = vperm.xlu0 %468, %v447
      %v470 = vpop.permute.xlu0 %469
      %473 = vset.pattern.permute.xlu0 0
      %474 = vperm.xlu0 %473, %v448
      %v475 = vpop.permute.xlu0 %474
      %478 = vset.pattern.permute.xlu0 0
      %479 = vperm.xlu0 %478, %v449
      %v480 = vpop.permute.xlu0 %479
      %483 = vset.pattern.permute.xlu0 0
      %484 = vperm.xlu0 %483, %v450
      %v485 = vpop.permute.xlu0 %484
      %488 = vset.pattern.permute.xlu0 0
      %489 = vperm.xlu0 %488, %v451
      %v490 = vpop.permute.xlu0 %489
      %vm492 = vcmask 64512
      %v494 = vsel %vm492, %v436, 0
      %v497 = vsel %vm492, %v437, 0
      %v500 = vsel %vm492, %v438, 0
      %v503 = vsel %vm492, %v439, 0
      %v506 = vsel %vm492, %v440, 0
      %v509 = vsel %vm492, %v441, 0
      %v512 = vsel %vm492, %v442, 0
      %v515 = vsel %vm492, %v443, 0
      %517 = vmatprep.subr.mxu0 0.0
      %518 = vmatpush1.msra.mxu0 %v435
      %519 = vmatprep.subr.mxu0 0.0
      %520 = vmatpush1.msra.mxu0 0.0
      %521 = vmatprep.subr.mxu0 0.0
      %522 = vmatpush1.msra.mxu0 0.0
      %523 = vmatprep.subr.mxu0 0.0
      %524 = vmatpush1.msra.mxu0 0.0
      %525 = vmatprep.subr.mxu0 0.0
      %526 = vmatpush1.msra.mxu0 0.0
      %527 = vmatprep.subr.mxu0 0.0
      %528 = vmatpush1.msra.mxu0 0.0
      %529 = vmatprep.subr.mxu0 0.0
      %530 = vmatpush1.msra.mxu0 0.0
      %531 = vmatprep.subr.mxu0 0.0
      %532 = vmatpush1.msra.mxu0 0.0
      %533 = vmatprep.subr.mxu0 0.0
      %534 = vmatpush1.msra.mxu0 0.0
      %535 = vmatprep.subr.mxu0 0.0
      %536 = vmatpush1.msra.mxu0 0.0
      %537 = vmatprep.subr.mxu0 0.0
      %538 = vmatpush1.msra.mxu0 0.0
      %539 = vmatprep.subr.mxu0 0.0
      %540 = vmatpush1.msra.mxu0 0.0
      %541 = vmatprep.subr.mxu0 0.0
      %542 = vmatpush1.msra.mxu0 0.0
      %543 = vmatprep.subr.mxu0 0.0
      %544 = vmatpush1.msra.mxu0 0.0
      %545 = vmatprep.subr.mxu0 0.0
      %546 = vmatpush1.msra.mxu0 0.0
      %547 = vmatprep.subr.mxu0 0.0
      %548 = vmatpush1.msra.mxu0 0.0
      %549 = vmatprep.subr.mxu0 0.0
      %550 = vmatpush1.msra.mxu0 0.0
      %551 = vmatprep.subr.mxu0 0.0
      %552 = vmatpush1.msra.mxu0 0.0
      %553 = vmatprep.subr.mxu0 0.0
      %554 = vmatpush1.msra.mxu0 0.0
      %555 = vmatprep.subr.mxu0 0.0
      %556 = vmatpush1.msra.mxu0 0.0
      %557 = vmatprep.subr.mxu0 0.0
      %558 = vmatpush1.msra.mxu0 0.0
      %559 = vmatprep.subr.mxu0 0.0
      %560 = vmatpush1.msra.mxu0 0.0
      %561 = vmatprep.subr.mxu0 0.0
      %562 = vmatpush1.msra.mxu0 0.0
      %563 = vmatprep.subr.mxu0 0.0
      %564 = vmatpush1.msra.mxu0 0.0
      %565 = vmatprep.subr.mxu0 0.0
      %566 = vmatpush1.msra.mxu0 0.0
      %567 = vmatprep.subr.mxu0 0.0
      %568 = vmatpush1.msra.mxu0 0.0
      %569 = vmatprep.subr.mxu0 0.0
      %570 = vmatpush1.msra.mxu0 0.0
      %571 = vmatprep.subr.mxu0 0.0
      %572 = vmatpush1.msra.mxu0 0.0
      %573 = vmatprep.subr.mxu0 0.0
      %574 = vmatpush1.msra.mxu0 0.0
      %575 = vmatprep.subr.mxu0 0.0
      %576 = vmatpush1.msra.mxu0 0.0
      %577 = vmatprep.subr.mxu0 0.0
      %578 = vmatpush1.msra.mxu0 0.0
      %579 = vmatprep.subr.mxu0 0.0
      %580 = vmatpush1.msra.mxu0 0.0
      %581 = vmatprep.mubr.f32.mxu0 0.0
      %582 = vmatmul.mubr.f32.gmra.mrb[0].mxu0 %v494
      %v583 = vpop.f32.mrb[0].mxu0
      %v584 = vadd.f32 %v455, %v583
      %v585 = vpop.f32.mrb[0].mxu0
      %586 = vmatprep.mubr.f32.mxu0 0.0
      %587 = vmatmul.mubr.f32.gmra.mrb[0].mxu0 %v497
      %v588 = vpop.f32.mrb[0].mxu0
      %v589 = vadd.f32 %v460, %v588
      %v590 = vpop.f32.mrb[0].mxu0
      %591 = vmatprep.mubr.f32.mxu0 0.0
      %592 = vmatmul.mubr.f32.gmra.mrb[0].mxu0 %v500
      %v593 = vpop.f32.mrb[0].mxu0
      %v594 = vadd.f32 %v465, %v593
      %v595 = vpop.f32.mrb[0].mxu0
      %596 = vmatprep.mubr.f32.mxu0 0.0
      %597 = vmatmul.mubr.f32.gmra.mrb[0].mxu0 %v503
      %v598 = vpop.f32.mrb[0].mxu0
      %v599 = vadd.f32 %v470, %v598
      %v600 = vpop.f32.mrb[0].mxu0
      %601 = vmatprep.mubr.f32.mxu0 0.0
      %602 = vmatmul.mubr.f32.gmra.mrb[0].mxu0 %v506
      %v603 = vpop.f32.mrb[0].mxu0
      %v604 = vadd.f32 %v475, %v603
      %v605 = vpop.f32.mrb[0].mxu0
      %606 = vmatprep.mubr.f32.mxu0 0.0
      %607 = vmatmul.mubr.f32.gmra.mrb[0].mxu0 %v509
      %v608 = vpop.f32.mrb[0].mxu0
      %v609 = vadd.f32 %v480, %v608
      %v610 = vpop.f32.mrb[0].mxu0
      %611 = vmatprep.mubr.f32.mxu0 0.0
      %612 = vmatmul.mubr.f32.gmra.mrb[0].mxu0 %v512
      %v613 = vpop.f32.mrb[0].mxu0
      %v614 = vadd.f32 %v485, %v613
      %v615 = vpop.f32.mrb[0].mxu0
      %616 = vmatprep.mubr.f32.mxu0 0.0
      %617 = vmatmul.mubr.f32.gmra.mrb[0].mxu0 %v515
      %v618 = vpop.f32.mrb[0].mxu0
      %v619 = vadd.f32 %v490, %v618
      %v620 = vpop.f32.mrb[0].mxu0
      %621 = vdwg.mxu0
      %vm622 = vcmask 15360
      %v623 = vsel %vm622, %v584, 0.0
      %624 = vadd.xlane.f32.xlu0 %v623
      %v625 = vpop.xlane.xlu0 %624
      %v626 = vsel %vm622, %v589, 0.0
      %627 = vadd.xlane.f32.xlu0 %v626
      %v628 = vpop.xlane.xlu0 %627
      %v629 = vsel %vm622, %v594, 0.0
      %630 = vadd.xlane.f32.xlu0 %v629
      %v631 = vpop.xlane.xlu0 %630
      %v632 = vsel %vm622, %v599, 0.0
      %633 = vadd.xlane.f32.xlu0 %v632
      %v634 = vpop.xlane.xlu0 %633
      %v635 = vsel %vm622, %v604, 0.0
      %636 = vadd.xlane.f32.xlu0 %v635
      %v637 = vpop.xlane.xlu0 %636
      %v638 = vsel %vm622, %v609, 0.0
      %639 = vadd.xlane.f32.xlu0 %v638
      %v640 = vpop.xlane.xlu0 %639
      %v641 = vsel %vm622, %v614, 0.0
      %642 = vadd.xlane.f32.xlu0 %v641
      %v643 = vpop.xlane.xlu0 %642
      %v644 = vsel %vm622, %v619, 0.0
      %645 = vadd.xlane.f32.xlu0 %v644
      %v646 = vpop.xlane.xlu0 %645
      %v647 = vxor.u32 %v625, 2147483648
      %v648 = vxor.u32 %v628, 2147483648
      %v649 = vxor.u32 %v631, 2147483648
      %v650 = vxor.u32 %v634, 2147483648
      %v651 = vxor.u32 %v637, 2147483648
      %v652 = vxor.u32 %v640, 2147483648
      %v653 = vxor.u32 %v643, 2147483648
      %v654 = vxor.u32 %v646, 2147483648
      %v655 = vmul.f32 %v647, 1.442695
      %v656 = vpow.pop %v655
      %v657 = vmul.f32 %v648, 1.442695
      %v658 = vpow.pop %v657
      %v659 = vmul.f32 %v649, 1.442695
      %v660 = vpow.pop %v659
      %v661 = vmul.f32 %v650, 1.442695
      %v662 = vpow.pop %v661
      %v663 = vmul.f32 %v651, 1.442695
      %v664 = vpow.pop %v663
      %v665 = vmul.f32 %v652, 1.442695
      %v666 = vpow.pop %v665
      %v667 = vmul.f32 %v653, 1.442695
      %v668 = vpow.pop %v667
      %v669 = vmul.f32 %v654, 1.442695
      %v670 = vpow.pop %v669
      %v671 = vadd.f32 %v656, 1.0
      %v672 = vadd.f32 %v658, 1.0
      %v673 = vadd.f32 %v660, 1.0
      %v674 = vadd.f32 %v662, 1.0
      %v675 = vadd.f32 %v664, 1.0
      %v676 = vadd.f32 %v666, 1.0
      %v677 = vadd.f32 %v668, 1.0
      %v678 = vadd.f32 %v670, 1.0
      %v679 = vrcp.pop %v671
      %v680 = vmul.f32 1.0, %v679
      %v681 = vrcp.pop %v672
      %v682 = vmul.f32 1.0, %v681
      %v683 = vrcp.pop %v673
      %v684 = vmul.f32 1.0, %v683
      %v685 = vrcp.pop %v674
      %v686 = vmul.f32 1.0, %v685
      %v687 = vrcp.pop %v675
      %v688 = vmul.f32 1.0, %v687
      %v689 = vrcp.pop %v676
      %v690 = vmul.f32 1.0, %v689
      %v691 = vrcp.pop %v677
      %v692 = vmul.f32 1.0, %v691
      %v693 = vrcp.pop %v678
      %v694 = vmul.f32 1.0, %v693
      %v695 = vmul.f32 %v225, %v680
      %v696 = vmul.f32 %v226, %v680
      %v697 = vmul.f32 %v227, %v680
      %v698 = vmul.f32 %v228, %v680
      %v699 = vmul.f32 %v229, %v682
      %v700 = vmul.f32 %v230, %v682
      %v701 = vmul.f32 %v231, %v682
      %v702 = vmul.f32 %v232, %v682
      %v703 = vmul.f32 %v233, %v684
      %v704 = vmul.f32 %v234, %v684
      %v705 = vmul.f32 %v235, %v684
      %v706 = vmul.f32 %v236, %v684
      %v707 = vmul.f32 %v237, %v686
      %v708 = vmul.f32 %v238, %v686
      %v709 = vmul.f32 %v239, %v686
      %v710 = vmul.f32 %v240, %v686
      %v711 = vmul.f32 %v241, %v688
      %v712 = vmul.f32 %v242, %v688
      %v713 = vmul.f32 %v243, %v688
      %v714 = vmul.f32 %v244, %v688
      %v715 = vmul.f32 %v245, %v690
      %v716 = vmul.f32 %v246, %v690
      %v717 = vmul.f32 %v247, %v690
      %v718 = vmul.f32 %v248, %v690
      %v719 = vmul.f32 %v249, %v692
      %v720 = vmul.f32 %v250, %v692
      %v721 = vmul.f32 %v251, %v692
      %v722 = vmul.f32 %v252, %v692
      %v723 = vmul.f32 %v253, %v694
      %v724 = vmul.f32 %v254, %v694
      %v725 = vmul.f32 %v255, %v694
      %v726 = vmul.f32 %v256, %v694
      %727 = vst [vmem:[%s224] sm:$0xff] %v695
      %728 = vst [vmem:[%s224 + $0x8] sm:$0xff] %v696
      %729 = vst [vmem:[%s224 + $0x10] sm:$0xff] %v697
      %730 = vst [vmem:[%s224 + $0x18] sm:$0xff] %v698
      %731 = vst [vmem:[%s224 + $0x20] sm:$0xff] %v699
      %732 = vst [vmem:[%s224 + $0x28] sm:$0xff] %v700
      %733 = vst [vmem:[%s224 + $0x30] sm:$0xff] %v701
      %734 = vst [vmem:[%s224 + $0x38] sm:$0xff] %v702
      %735 = vst [vmem:[%s224 + $0x40] sm:$0xff] %v703
      %736 = vst [vmem:[%s224 + $0x48] sm:$0xff] %v704
      %737 = vst [vmem:[%s224 + $0x50] sm:$0xff] %v705
      %738 = vst [vmem:[%s224 + $0x58] sm:$0xff] %v706
      %739 = vst [vmem:[%s224 + $0x60] sm:$0xff] %v707
      %740 = vst [vmem:[%s224 + $0x68] sm:$0xff] %v708
      %741 = vst [vmem:[%s224 + $0x70] sm:$0xff] %v709
      %742 = vst [vmem:[%s224 + $0x78] sm:$0xff] %v710
      %743 = vst [vmem:[%s224 + $0x80] sm:$0xff] %v711
      %744 = vst [vmem:[%s224 + $0x88] sm:$0xff] %v712
      %745 = vst [vmem:[%s224 + $0x90] sm:$0xff] %v713
      %746 = vst [vmem:[%s224 + $0x98] sm:$0xff] %v714
      %747 = vst [vmem:[%s224 + $0xa0] sm:$0xff] %v715
      %748 = vst [vmem:[%s224 + $0xa8] sm:$0xff] %v716
      %749 = vst [vmem:[%s224 + $0xb0] sm:$0xff] %v717
      %750 = vst [vmem:[%s224 + $0xb8] sm:$0xff] %v718
      %751 = vst [vmem:[%s224 + $0xc0] sm:$0xff] %v719
      %752 = vst [vmem:[%s224 + $0xc8] sm:$0xff] %v720
      %753 = vst [vmem:[%s224 + $0xd0] sm:$0xff] %v721
      %754 = vst [vmem:[%s224 + $0xd8] sm:$0xff] %v722
      %755 = vst [vmem:[%s224 + $0xe0] sm:$0xff] %v723
      %756 = vst [vmem:[%s224 + $0xe8] sm:$0xff] %v724
      %757 = vst [vmem:[%s224 + $0xf0] sm:$0xff] %v725
      %758 = vst [vmem:[%s224 + $0xf8] sm:$0xff] %v726
      %p759 = scmp.lt.s32.totalorder %s16, 1
      %s760 = scalar_select %p759, %s16, 1
      %s761 = smul.addr %s760, 32
      %s762 = smul.addr %s761, 8
      %s763 = scalar_lea.vmem %s5, %s762
      // Predicated region
      $region41: #{channel_gate.1} parent=39 // pred_check
        %p764 = pneg %p144
      $region42: #{channel_gate.1} parent=39 // pred_check_branch
        %766 = sbr.rel (%p764) target = $region44
      $region43: #{channel_gate.1} parent=39 // pred_region
        _
      $region44: #{channel_gate.1} parent=39 // pred_fallthru
        _
    $region40: #{channel_gate.1} parent=5 // pred_fallthru
      _
    %p767 = scmp.le.s32.totalorder 2, %s11
    // Predicated region
    $region45: #{channel_gate.1} parent=5 // pred_check
      %p768 = pneg %p767
    $region46: #{channel_gate.1} parent=5 // pred_check_branch
      %770 = sbr.rel (%p768) target = $region48
    $region47: #{channel_gate.1} parent=5 // pred_region
      %s771 = ssub.s32 %s11, 2
      // Predicated region
      $region49: #{channel_gate.1} parent=47 // pred_check
        %p772 = pneg %p150
      $region50: #{channel_gate.1} parent=47 // pred_check_branch
        %774 = sbr.rel (%p772) target = $region52
      $region51: #{channel_gate.1} parent=47 // pred_region
        %p775 = scmp.lt.s32.totalorder %s17, 1
        %s776 = scalar_select %p775, %s17, 1
        %s777 = smul.addr %s776, 32
        %s778 = smul.addr %s777, 8
        %s779 = scalar_lea.vmem %s5, %s778
      $region52: #{channel_gate.1} parent=47 // pred_fallthru
        _
    $region48: #{channel_gate.1} parent=5 // pred_fallthru
      _
  $region6: #{channel_gate.1} parent=0 // loop_footer
    %s15 = sadd.s32 1, %s11
  $region7: #{channel_gate.1} parent=0 // loop_footer_branch
    %10 = sbr.rel target = $region3
  $region8: #{channel_gate.1} parent=0 // loop_exit
    _

</llo_original>
